<compile_context>
chip_gen: v7x
topology: tpu7x:2x2x1
jax: 0.10.0
libtpu: 0.0.40
codegen_flags: <defaults>
</compile_context>

<pallas_src>
import jax
import jax.numpy as jnp
from jax.experimental import pallas as pl
from jax.experimental.pallas import tpu as pltpu


def _round_up(x, m):
    return ((x + m - 1) // m) * m


def _prompt_embed_kernel(ids_ref, pids_ref, tab_ref, seg_ref, base_ref, out_ref):
    # ids_ref : (TG, P*L) int32  token id of slot (g, p) repeated L times along lanes
    # pids_ref: (1,  P*L) int32  prompt ids tiled P times
    # tab_ref : (P*L, P*D)       kron(eye(P), embedding.weight)
    # seg_ref : (P*L, P*D)       kron(eye(P), ones(L, D))  (segment-hit indicator)
    # base_ref: (1,  P*D)        tile(embedding.weight[0], P)  (row-0 fallback)
    # out_ref : (TG, P*D)
    match = (ids_ref[...] == pids_ref[...]).astype(tab_ref.dtype)          # (TG, PL)
    gathered = jnp.dot(match, tab_ref[...], preferred_element_type=jnp.float32)
    hits = jnp.dot(match, seg_ref[...], preferred_element_type=jnp.float32)
    out = gathered + (1.0 - hits) * base_ref[...].astype(jnp.float32)
    out_ref[...] = out.astype(out_ref.dtype)


def embedding_prompt_encoder_forward(
    prompt_token_ids, input_ids, emb_weight, *, id_offset=0, tile_rows=512
):
    """Pallas implementation of EmbeddingPromptEncoder.forward."""
    L, D = emb_weight.shape
    orig_shape = prompt_token_ids.shape
    ids_flat = prompt_token_ids.reshape(-1).astype(jnp.int32)
    N = int(ids_flat.shape[0])
    dsize = jnp.dtype(emb_weight.dtype).itemsize

    if id_offset > 0:
        # torch: embedding(ids - id_offset). Equivalent to matching against
        # arange(L) + id_offset; out-of-range ids fall back to row 0.
        pids = jnp.arange(L, dtype=jnp.int32) + jnp.int32(id_offset)
    else:
        pids = input_ids.astype(jnp.int32).reshape(-1)

    # ---- pack P tokens per output row so the output lane axis is >= 128 wide.
    P = max(1, 128 // D)
    PL, PD = P * L, P * D
    G = pl.cdiv(N, P)                       # packed output rows

    # ---- tile size: big tiles (per-grid-step overhead ~0.35us), multiple of 8,
    #      >=2 grid steps when possible (v7x 2 TensorCores), VMEM-budgeted.
    tile_g = min(int(tile_rows), _round_up(G, 8))
    if G > 8:
        tile_g = min(tile_g, _round_up(pl.cdiv(G, 2), 8))
    tile_g = max(8, _round_up(tile_g, 8))

    def _vmem_est(tg):
        tiles = 2 * tg * PL * 4 + 2 * tg * PD * dsize          # dbl-buffered ids/out
        resident = 2 * (2 * PL * PD * dsize + PL * 4 + PD * dsize)
        return tiles + resident

    while tile_g > 8 and _vmem_est(tile_g) > 12 * 1024 * 1024:
        tile_g = max(8, _round_up(tile_g // 2, 8))

    G_pad = _round_up(G, tile_g)
    N_pad = G_pad * P

    # ---- one-time host/XLA layout prep (cheap; table is ~PL*PD*dsize bytes).
    ids_pad = jnp.pad(ids_flat, (0, N_pad - N), constant_values=-1)  # -1 never matches
    ids_grp = ids_pad.reshape(G_pad, P)
    # ids_tiled[g, p*L + l] = id of token (g, p)
    ids_tiled = jnp.broadcast_to(ids_grp[:, :, None], (G_pad, P, L)).reshape(G_pad, PL)
    # pids_rep[0, p*L + l] = pids[l]
    pids_rep = jnp.tile(pids.reshape(1, L), (1, P))
    eye_p = jnp.eye(P, dtype=emb_weight.dtype)
    tab = jnp.kron(eye_p, emb_weight)                              # (PL, PD)
    seg = jnp.kron(eye_p, jnp.ones((L, D), emb_weight.dtype))      # (PL, PD)
    base = jnp.tile(emb_weight[0:1, :], (1, P))                    # (1, PD)

    grid = (G_pad // tile_g,)

    cost = pl.CostEstimate(
        flops=4 * G_pad * PL * PD,
        transcendentals=0,
        bytes_accessed=(G_pad * PL * 4 + 2 * PL * PD * dsize + PL * 4
                        + PD * dsize + G_pad * PD * dsize),
    )

    out_packed = pl.pallas_call(
        _prompt_embed_kernel,
        out_shape=jax.ShapeDtypeStruct((G_pad, PD), emb_weight.dtype),
        grid_spec=pltpu.PrefetchScalarGridSpec(
            num_scalar_prefetch=0,
            grid=grid,
            in_specs=[
                pl.BlockSpec((tile_g, PL), lambda i: (i, 0)),  # token ids tile
                pl.BlockSpec((1, PL), lambda i: (0, 0)),       # prompt ids (resident)
                pl.BlockSpec((PL, PD), lambda i: (0, 0)),      # block-diag emb table
                pl.BlockSpec((PL, PD), lambda i: (0, 0)),      # segment-hit indicator
                pl.BlockSpec((1, PD), lambda i: (0, 0)),       # row-0 fallback
            ],
            out_specs=pl.BlockSpec((tile_g, PD), lambda i: (i, 0)),
        ),
        compiler_params=pltpu.CompilerParams(
            dimension_semantics=("parallel",),
            vmem_limit_bytes=32 * 1024 * 1024,
        ),
        cost_estimate=cost,
    )(ids_tiled, pids_rep, tab, seg, base)

    # (G_pad, P*D) -> (N_pad, D) is a free row-major reshape; drop the padding.
    out = out_packed.reshape(N_pad, D)[:N]

    if id_offset > 0:
        # torch's offset branch preserves the input shape.
        return out.reshape(orig_shape + (D,))
    # torch's matching branch flattens via view(-1, 1): output is (N_flat, D).
    return out


if __name__ == "__main__":
    key = jax.random.PRNGKey(0)
    k_emb, k_sel, k_sel2 = jax.random.split(key, 3)

    # Module hyper-params (synthetic, deterministic init).
    length = 10                # self.length: number of prompt tokens
    embedding_dim = 32         # self.embedding_dim
    prompt_ids = jnp.arange(32000, 32000 + length, dtype=jnp.int32)
    emb_weight = jax.random.normal(k_emb, (length, embedding_dim), dtype=jnp.float32)

    # --- default path (id_offset == 0): match against self.input_ids -------------
    batch, seq = 2, 8
    sel = jax.random.randint(k_sel, (batch, seq), 0, length)
    prompt_token_ids = prompt_ids[sel]           # raw vocab-space ids

    out = embedding_prompt_encoder_forward(
        prompt_token_ids, prompt_ids, emb_weight, id_offset=0
    )
    out = jax.block_until_ready(out)

    ref_idx = jnp.argmax(
        (prompt_token_ids.reshape(-1, 1) == prompt_ids).astype(jnp.int32), axis=1
    )
    ref = emb_weight[ref_idx]
    assert out.shape == (batch * seq, embedding_dim), out.shape
    assert jnp.allclose(out, ref, atol=1e-6), float(jnp.abs(out - ref).max())

    # --- offset path (id_offset > 0): embedding(ids - id_offset) -----------------
    id_offset = 5000
    sel2 = jax.random.randint(k_sel2, (batch, seq), 0, length)
    tok2 = sel2.astype(jnp.int32) + id_offset
    out2 = embedding_prompt_encoder_forward(
        tok2, None, emb_weight, id_offset=id_offset
    )
    out2 = jax.block_until_ready(out2)
    ref2 = emb_weight[sel2]
    assert out2.shape == (batch, seq, embedding_dim), out2.shape
    assert jnp.allclose(out2, ref2, atol=1e-6), float(jnp.abs(out2 - ref2).max())

    print("KERNEL_OK")
</pallas_src>

<mosaic_0001>
module attributes {stable_mosaic.version = 11 : i64} {
  func.func @_prompt_embed_kernel(%arg0: i32, %arg1: memref<8x40xi32, #tpu.memory_space<vmem>>, %arg2: memref<1x40xi32, #tpu.memory_space<vmem>>, %arg3: memref<40x128xf32, #tpu.memory_space<vmem>>, %arg4: memref<40x128xf32, #tpu.memory_space<vmem>>, %arg5: memref<1x128xf32, #tpu.memory_space<vmem>>, %arg6: memref<8x128xf32, #tpu.memory_space<vmem>>) attributes {dimension_semantics = [#tpu.dimension_semantics<parallel>], iteration_bounds = array<i64: 1>, scalar_prefetch = 0 : i64, scratch_operands = 0 : i64, tpu.core_type = #tpu.core_type<tc>, window_params = [{transform_indices = @transform_0, window_bounds = array<i64: 8, 40>}, {pipeline_mode = #tpu.pipeline_mode<synchronous>, transform_indices = @transform_1, window_bounds = array<i64: 1, 40>}, {pipeline_mode = #tpu.pipeline_mode<synchronous>, transform_indices = @transform_2, window_bounds = array<i64: 40, 128>}, {pipeline_mode = #tpu.pipeline_mode<synchronous>, transform_indices = @transform_3, window_bounds = array<i64: 40, 128>}, {pipeline_mode = #tpu.pipeline_mode<synchronous>, transform_indices = @transform_4, window_bounds = array<i64: 1, 128>}, {transform_indices = @transform_5, window_bounds = array<i64: 8, 128>}]} {
    %c0 = arith.constant 0 : index
    %c0_0 = arith.constant 0 : index
    %0 = vector.load %arg1[%c0, %c0_0] : memref<8x40xi32, #tpu.memory_space<vmem>>, vector<8x40xi32>
    %c0_1 = arith.constant 0 : index
    %c0_2 = arith.constant 0 : index
    %1 = vector.load %arg2[%c0_1, %c0_2] : memref<1x40xi32, #tpu.memory_space<vmem>>, vector<1x40xi32>
    %2 = vector.broadcast %1 : vector<1x40xi32> to vector<8x40xi32>
    %3 = arith.cmpi eq, %0, %2 : vector<8x40xi32>
    %4 = arith.extui %3 : vector<8x40xi1> to vector<8x40xi32>
    %5 = arith.sitofp %4 : vector<8x40xi32> to vector<8x40xf32>
    %c0_3 = arith.constant 0 : index
    %c0_4 = arith.constant 0 : index
    %6 = vector.load %arg3[%c0_3, %c0_4] : memref<40x128xf32, #tpu.memory_space<vmem>>, vector<40x128xf32>
    %cst = arith.constant dense<0.000000e+00> : vector<8x128xf32>
    %7 = tpu.matmul %5, %6, %cst {dimension_numbers = #tpu.dot_dimension_numbers<[1], [0], [0], [1], [0, 0, 1, 1], [], []>} : vector<8x40xf32>, vector<40x128xf32>, vector<8x128xf32> -> vector<8x128xf32>
    %c0_5 = arith.constant 0 : index
    %c0_6 = arith.constant 0 : index
    %8 = vector.load %arg4[%c0_5, %c0_6] : memref<40x128xf32, #tpu.memory_space<vmem>>, vector<40x128xf32>
    %cst_7 = arith.constant dense<0.000000e+00> : vector<8x128xf32>
    %9 = tpu.matmul %5, %8, %cst_7 {dimension_numbers = #tpu.dot_dimension_numbers<[1], [0], [0], [1], [0, 0, 1, 1], [], []>} : vector<8x40xf32>, vector<40x128xf32>, vector<8x128xf32> -> vector<8x128xf32>
    %cst_8 = arith.constant 1.000000e+00 : f32
    %10 = vector.broadcast %cst_8 : f32 to vector<8x128xf32>
    %11 = arith.subf %10, %9 : vector<8x128xf32>
    %c0_9 = arith.constant 0 : index
    %c0_10 = arith.constant 0 : index
    %12 = vector.load %arg5[%c0_9, %c0_10] : memref<1x128xf32, #tpu.memory_space<vmem>>, vector<1x128xf32>
    %13 = vector.broadcast %12 : vector<1x128xf32> to vector<8x128xf32>
    %14 = arith.mulf %11, %13 : vector<8x128xf32>
    %15 = arith.addf %7, %14 : vector<8x128xf32>
    %c0_11 = arith.constant 0 : index
    %c0_12 = arith.constant 0 : index
    %16 = vector.load %arg6[%c0_11, %c0_12] : memref<8x128xf32, #tpu.memory_space<vmem>>, vector<8x128xf32>
    tpu.vector_store %arg6[%c0_11, %c0_12], %15 {strides = array<i32>} : memref<8x128xf32, #tpu.memory_space<vmem>>, vector<8x128xf32>,
    return
  }
  func.func @transform_0(%arg0: i32) -> (i32, i32) {
    %c0_i32 = arith.constant 0 : i32
    %c0_i32_0 = arith.constant 0 : i32
    return %arg0, %c0_i32 : i32, i32
  }
  func.func @transform_1(%arg0: i32) -> (i32, i32) {
    %c0_i32 = arith.constant 0 : i32
    %c0_i32_0 = arith.constant 0 : i32
    %c0_i32_1 = arith.constant 0 : i32
    return %c0_i32, %c0_i32_0 : i32, i32
  }
  func.func @transform_2(%arg0: i32) -> (i32, i32) {
    %c0_i32 = arith.constant 0 : i32
    %c0_i32_0 = arith.constant 0 : i32
    %c0_i32_1 = arith.constant 0 : i32
    return %c0_i32, %c0_i32_0 : i32, i32
  }
  func.func @transform_3(%arg0: i32) -> (i32, i32) {
    %c0_i32 = arith.constant 0 : i32
    %c0_i32_0 = arith.constant 0 : i32
    %c0_i32_1 = arith.constant 0 : i32
    return %c0_i32, %c0_i32_0 : i32, i32
  }
  func.func @transform_4(%arg0: i32) -> (i32, i32) {
    %c0_i32 = arith.constant 0 : i32
    %c0_i32_0 = arith.constant 0 : i32
    %c0_i32_1 = arith.constant 0 : i32
    return %c0_i32, %c0_i32_0 : i32, i32
  }
  func.func @transform_5(%arg0: i32) -> (i32, i32) {
    %c0_i32 = arith.constant 0 : i32
    %c0_i32_0 = arith.constant 0 : i32
    return %arg0, %c0_i32 : i32, i32
  }
}

</mosaic_0001>

<llo_original>
// kernel: tpu_custom_call.1
$region0: #{tpu_custom_call.1}
  #allocation0 [shape = 'u32[]', space=smem, size = 0x4, offset = 0x4, fixed_abs, tag = 'smem constant byte address 0x4 - core index']
  #allocation1 [shape = 'u32[144,128]{1,0:T(1,128)}', space=vmem, size = 0x12000, scoped, tag = 'internal scratch']
  %s0 = inlined_call_operand.hbm [shape: s32[8,40], index: 0, kind: input, shape index: {}]
  %s1 = inlined_call_operand.vmem [shape: s32[1,40], index: 1, kind: input, shape index: {}]
  %s2 = inlined_call_operand.hbm [shape: f32[40,128], index: 2, kind: input, shape index: {}]
  %s3 = inlined_call_operand.hbm [shape: f32[40,128], index: 3, kind: input, shape index: {}]
  %s4 = inlined_call_operand.vmem [shape: f32[1,128], index: 4, kind: input, shape index: {}]
  %s5 = inlined_call_operand.hbm [shape: f32[8,128], index: 5, kind: output, shape index: {}]
  %s6 = sld [smem:[#allocation0]]
  $region42: #{tpu_custom_call.1} parent=0
    _
  %s8 = ssub.s32 1, %s6
  %s9 = scalar_select 0, %s8, %s6
  $region1: #{tpu_custom_call.1} parent=0
    #allocation2 [shape = 'u8[4096]{0}', space=vmem, size = 0x1000, scoped, tag = 'input window, operand 0, single buffered']
    #allocation3 [shape = 's32[1]{0}', space=sflag, size = 0x4, scoped, tag = 'scoped memory for tpu_custom_call.1']
    #allocation4 [shape = 's32[1]{0}', space=sflag, size = 0x4, scoped, tag = 'scoped memory for tpu_custom_call.1']
    #allocation5 [shape = 'u8[20480]{0}', space=vmem, size = 0x5000, scoped, tag = 'input window, operand 2, single buffered']
    #allocation6 [shape = 's32[1]{0}', space=sflag, size = 0x4, scoped, tag = 'scoped memory for tpu_custom_call.1']
    #allocation7 [shape = 'u8[20480]{0}', space=vmem, size = 0x5000, scoped, tag = 'input window, operand 3, single buffered']
    #allocation8 [shape = 'u8[4096]{0}', space=vmem, size = 0x1000, scoped, tag = 'output window, operand 0, single buffered']
    %10 = vsyncpa [#allocation3], 0
    %11 = vsyncpa [#allocation6], 0
    %12 = vsyncpa [#allocation4], 0
    // Predicated region
    $region2: #{tpu_custom_call.1} parent=1 // pred_check
      _
    $region3: #{tpu_custom_call.1} parent=1 // pred_check_branch
      %14 = sbr.rel (0) target = $region5
    $region4: #{tpu_custom_call.1} parent=1 // pred_region
      %s16 = ssub.s32 128, 128
      %17 = vsyncadd [#allocation3], %s16
      %s19 = sshll.u32 [#allocation2], 4
      %s20 = int_to_ptr.vmem [resolvable:$true] %s19
      %22 = dma.hbm_to_vmem [thread:$0]  %s0, 128, %s20, [#allocation3]
    $region5: #{tpu_custom_call.1} parent=1 // pred_fallthru
      _
    // Predicated region
    $region6: #{tpu_custom_call.1} parent=1 // pred_check
      _
    $region7: #{tpu_custom_call.1} parent=1 // pred_check_branch
      %24 = sbr.rel (0) target = $region9
    $region8: #{tpu_custom_call.1} parent=1 // pred_region
      _
    $region9: #{tpu_custom_call.1} parent=1 // pred_fallthru
      _
    // Predicated region
    $region10: #{tpu_custom_call.1} parent=1 // pred_check
      _
    $region11: #{tpu_custom_call.1} parent=1 // pred_check_branch
      %26 = sbr.rel (0) target = $region13
    $region12: #{tpu_custom_call.1} parent=1 // pred_region
      %s28 = ssub.s32 640, 640
      %29 = vsyncadd [#allocation6], %s28
      %s30 = sshll.u32 [#allocation5], 4
      %s31 = int_to_ptr.vmem [resolvable:$true] %s30
      %36 = dma.hbm_to_vmem [thread:$0]  %s2, 640, %s31, [#allocation6], 128, 128, 8
    $region13: #{tpu_custom_call.1} parent=1 // pred_fallthru
      _
    // Predicated region
    $region14: #{tpu_custom_call.1} parent=1 // pred_check
      _
    $region15: #{tpu_custom_call.1} parent=1 // pred_check_branch
      %38 = sbr.rel (0) target = $region17
    $region16: #{tpu_custom_call.1} parent=1 // pred_region
      %s40 = ssub.s32 640, 640
      %41 = vsyncadd [#allocation6], %s40
      %s42 = sshll.u32 [#allocation7], 4
      %s43 = int_to_ptr.vmem [resolvable:$true] %s42
      %48 = dma.hbm_to_vmem [thread:$0]  %s3, 640, %s43, [#allocation6], 128, 128, 8
    $region17: #{tpu_custom_call.1} parent=1 // pred_fallthru
      _
    // Predicated region
    $region18: #{tpu_custom_call.1} parent=1 // pred_check
      _
    $region19: #{tpu_custom_call.1} parent=1 // pred_check_branch
      %50 = sbr.rel (0) target = $region21
    $region20: #{tpu_custom_call.1} parent=1 // pred_region
      _
    $region21: #{tpu_custom_call.1} parent=1 // pred_fallthru
      _
    // Predicated region
    $region22: #{tpu_custom_call.1} parent=1 // pred_check
      _
    $region23: #{tpu_custom_call.1} parent=1 // pred_check_branch
      %52 = sbr.rel (0) target = $region25
    $region24: #{tpu_custom_call.1} parent=1 // pred_region
      %53 = dma.done [#allocation3], 128
    $region25: #{tpu_custom_call.1} parent=1 // pred_fallthru
      _
    // Predicated region
    $region26: #{tpu_custom_call.1} parent=1 // pred_check
      _
    $region27: #{tpu_custom_call.1} parent=1 // pred_check_branch
      %55 = sbr.rel (0) target = $region29
    $region28: #{tpu_custom_call.1} parent=1 // pred_region
      %56 = dma.done [#allocation6], 640
    $region29: #{tpu_custom_call.1} parent=1 // pred_fallthru
      _
    // Predicated region
    $region30: #{tpu_custom_call.1} parent=1 // pred_check
      _
    $region31: #{tpu_custom_call.1} parent=1 // pred_check_branch
      %58 = sbr.rel (0) target = $region33
    $region32: #{tpu_custom_call.1} parent=1 // pred_region
      %59 = dma.done [#allocation6], 640
    $region33: #{tpu_custom_call.1} parent=1 // pred_fallthru
      _
    %v60 = vld [vmem:[#allocation2] sm:$0xff]
    %v61 = vld [vmem:[%s1] sm:$0x1]
    %v62 = vlaneseq
    %v63 = vshrl.u32 %v62, 7
    %v64 = vsub.s32 0, %v63
    %v65 = vrot.slane %v61, %v64
    %vm66 = vcmp.eq.s32.totalorder %v60, %v65
    %v67 = vsel %vm66, 1, 0
    %v68 = vcvt.s32.f32 %v67
    %v69 = vld [vmem:[#allocation5] sm:$0xff]
    %v70 = vld [vmem:[#allocation5 + $0x8] sm:$0xff]
    %v71 = vld [vmem:[#allocation5 + $0x10] sm:$0xff]
    %v72 = vld [vmem:[#allocation5 + $0x18] sm:$0xff]
    %v73 = vld [vmem:[#allocation5 + $0x20] sm:$0xff]
    %v74 = vld [vmem:[#allocation7] sm:$0xff]
    %v75 = vld [vmem:[#allocation7 + $0x8] sm:$0xff]
    %v76 = vld [vmem:[#allocation7 + $0x10] sm:$0xff]
    %v77 = vld [vmem:[#allocation7 + $0x18] sm:$0xff]
    %v78 = vld [vmem:[#allocation7 + $0x20] sm:$0xff]
    %vm79 = vcmask 326656
    %v81 = vsel %vm79, %v68, 0
    %83 = vmatprep.subr.mxu0 0.0
    %84 = vmatpush1.msra.mxu0 %v74
    %85 = vmatprep.subr.mxu0 0.0
    %86 = vmatpush1.msra.mxu0 %v75
    %87 = vmatprep.subr.mxu0 0.0
    %88 = vmatpush1.msra.mxu0 %v76
    %89 = vmatprep.subr.mxu0 0.0
    %90 = vmatpush1.msra.mxu0 %v77
    %91 = vmatprep.subr.mxu0 0.0
    %92 = vmatpush1.msra.mxu0 %v78
    %93 = vmatprep.subr.mxu0 0.0
    %94 = vmatpush1.msra.mxu0 0.0
    %95 = vmatprep.subr.mxu0 0.0
    %96 = vmatpush1.msra.mxu0 0.0
    %97 = vmatprep.subr.mxu0 0.0
    %98 = vmatpush1.msra.mxu0 0.0
    %99 = vmatprep.subr.mxu0 0.0
    %100 = vmatpush1.msra.mxu0 0.0
    %101 = vmatprep.subr.mxu0 0.0
    %102 = vmatpush1.msra.mxu0 0.0
    %103 = vmatprep.subr.mxu0 0.0
    %104 = vmatpush1.msra.mxu0 0.0
    %105 = vmatprep.subr.mxu0 0.0
    %106 = vmatpush1.msra.mxu0 0.0
    %107 = vmatprep.subr.mxu0 0.0
    %108 = vmatpush1.msra.mxu0 0.0
    %109 = vmatprep.subr.mxu0 0.0
    %110 = vmatpush1.msra.mxu0 0.0
    %111 = vmatprep.subr.mxu0 0.0
    %112 = vmatpush1.msra.mxu0 0.0
    %113 = vmatprep.subr.mxu0 0.0
    %114 = vmatpush1.msra.mxu0 0.0
    %115 = vmatprep.subr.mxu0 0.0
    %116 = vmatpush1.msra.mxu0 0.0
    %117 = vmatprep.subr.mxu0 0.0
    %118 = vmatpush1.msra.mxu0 0.0
    %119 = vmatprep.subr.mxu0 0.0
    %120 = vmatpush1.msra.mxu0 0.0
    %121 = vmatprep.subr.mxu0 0.0
    %122 = vmatpush1.msra.mxu0 0.0
    %123 = vmatprep.subr.mxu0 0.0
    %124 = vmatpush1.msra.mxu0 0.0
    %125 = vmatprep.subr.mxu0 0.0
    %126 = vmatpush1.msra.mxu0 0.0
    %127 = vmatprep.subr.mxu0 0.0
    %128 = vmatpush1.msra.mxu0 0.0
    %129 = vmatprep.subr.mxu0 0.0
    %130 = vmatpush1.msra.mxu0 0.0
    %131 = vmatprep.subr.mxu0 0.0
    %132 = vmatpush1.msra.mxu0 0.0
    %133 = vmatprep.subr.mxu0 0.0
    %134 = vmatpush1.msra.mxu0 0.0
    %135 = vmatprep.subr.mxu0 0.0
    %136 = vmatpush1.msra.mxu0 0.0
    %137 = vmatprep.subr.mxu0 0.0
    %138 = vmatpush1.msra.mxu0 0.0
    %139 = vmatprep.subr.mxu0 0.0
    %140 = vmatpush1.msra.mxu0 0.0
    %141 = vmatprep.subr.mxu0 0.0
    %142 = vmatpush1.msra.mxu0 0.0
    %143 = vmatprep.subr.mxu0 0.0
    %144 = vmatpush1.msra.mxu0 0.0
    %145 = vmatprep.subr.mxu0 0.0
    %146 = vmatpush1.msra.mxu0 0.0
    %147 = vmatprep.mubr.f32.mxu0 0.0
    %148 = vmatmul.mubr.f32.gmra.mrb[0].mxu0 %v81
    %v149 = vpop.f32.mrb[0].mxu0
    %v150 = vadd.f32 0.0, %v149
    %v151 = vpop.f32.mrb[0].mxu0
    %152 = vdwg.mxu0
    %v153 = vsub.f32 1.0, %v150
    %v154 = vld [vmem:[%s4] sm:$0x1]
    %v156 = vlaneseq
    %v157 = vshrl.u32 %v156, 7
    %v158 = vsub.s32 0, %v157
    %v159 = vrot.slane %v154, %v158
    %v161 = vmul.f32 %v153, %v159
    %162 = vmatprep.subr.mxu0 0.0
    %163 = vmatpush1.msra.mxu0 %v69
    %164 = vmatprep.subr.mxu0 0.0
    %165 = vmatpush1.msra.mxu0 %v70
    %166 = vmatprep.subr.mxu0 0.0
    %167 = vmatpush1.msra.mxu0 %v71
    %168 = vmatprep.subr.mxu0 0.0
    %169 = vmatpush1.msra.mxu0 %v72
    %170 = vmatprep.subr.mxu0 0.0
    %171 = vmatpush1.msra.mxu0 %v73
    %172 = vmatprep.subr.mxu0 0.0
    %173 = vmatpush1.msra.mxu0 0.0
    %174 = vmatprep.subr.mxu0 0.0
    %175 = vmatpush1.msra.mxu0 0.0
    %176 = vmatprep.subr.mxu0 0.0
    %177 = vmatpush1.msra.mxu0 0.0
    %178 = vmatprep.subr.mxu0 0.0
    %179 = vmatpush1.msra.mxu0 0.0
    %180 = vmatprep.subr.mxu0 0.0
    %181 = vmatpush1.msra.mxu0 0.0
    %182 = vmatprep.subr.mxu0 0.0
    %183 = vmatpush1.msra.mxu0 0.0
    %184 = vmatprep.subr.mxu0 0.0
    %185 = vmatpush1.msra.mxu0 0.0
    %186 = vmatprep.subr.mxu0 0.0
    %187 = vmatpush1.msra.mxu0 0.0
    %188 = vmatprep.subr.mxu0 0.0
    %189 = vmatpush1.msra.mxu0 0.0
    %190 = vmatprep.subr.mxu0 0.0
    %191 = vmatpush1.msra.mxu0 0.0
    %192 = vmatprep.subr.mxu0 0.0
    %193 = vmatpush1.msra.mxu0 0.0
    %194 = vmatprep.subr.mxu0 0.0
    %195 = vmatpush1.msra.mxu0 0.0
    %196 = vmatprep.subr.mxu0 0.0
    %197 = vmatpush1.msra.mxu0 0.0
    %198 = vmatprep.subr.mxu0 0.0
    %199 = vmatpush1.msra.mxu0 0.0
    %200 = vmatprep.subr.mxu0 0.0
    %201 = vmatpush1.msra.mxu0 0.0
    %202 = vmatprep.subr.mxu0 0.0
    %203 = vmatpush1.msra.mxu0 0.0
    %204 = vmatprep.subr.mxu0 0.0
    %205 = vmatpush1.msra.mxu0 0.0
    %206 = vmatprep.subr.mxu0 0.0
    %207 = vmatpush1.msra.mxu0 0.0
    %208 = vmatprep.subr.mxu0 0.0
    %209 = vmatpush1.msra.mxu0 0.0
    %210 = vmatprep.subr.mxu0 0.0
    %211 = vmatpush1.msra.mxu0 0.0
    %212 = vmatprep.subr.mxu0 0.0
    %213 = vmatpush1.msra.mxu0 0.0
    %214 = vmatprep.subr.mxu0 0.0
    %215 = vmatpush1.msra.mxu0 0.0
    %216 = vmatprep.subr.mxu0 0.0
    %217 = vmatpush1.msra.mxu0 0.0
    %218 = vmatprep.subr.mxu0 0.0
    %219 = vmatpush1.msra.mxu0 0.0
    %220 = vmatprep.subr.mxu0 0.0
    %221 = vmatpush1.msra.mxu0 0.0
    %222 = vmatprep.subr.mxu0 0.0
    %223 = vmatpush1.msra.mxu0 0.0
    %224 = vmatprep.subr.mxu0 0.0
    %225 = vmatpush1.msra.mxu0 0.0
    %226 = vmatprep.mubr.f32.mxu0 0.0
    %227 = vmatmul.mubr.f32.gmra.mrb[0].mxu0 %v81
    %v228 = vpop.f32.mrb[0].mxu0
    %v229 = vadd.f32 %v161, %v228
    %v230 = vpop.f32.mrb[0].mxu0
    %231 = vdwg.mxu0
    %232 = vst [vmem:[#allocation8] sm:$0xff] %v229
    // Predicated region
    $region34: #{tpu_custom_call.1} parent=1 // pred_check
      _
    $region35: #{tpu_custom_call.1} parent=1 // pred_check_branch
      %234 = sbr.rel (0) target = $region37
    $region36: #{tpu_custom_call.1} parent=1 // pred_region
      %s236 = ssub.s32 128, 128
      %237 = vsyncadd [#allocation4], %s236
      %s239 = sshll.u32 [#allocation8], 4
      %s240 = int_to_ptr.vmem [resolvable:$true] %s239
      %242 = dma.vmem_to_hbm [thread:$0]  %s240, 128, %s5, [#allocation4]
    $region37: #{tpu_custom_call.1} parent=1 // pred_fallthru
      _
    // Predicated region
    $region38: #{tpu_custom_call.1} parent=1 // pred_check
      _
    $region39: #{tpu_custom_call.1} parent=1 // pred_check_branch
      %244 = sbr.rel (0) target = $region41
    $region40: #{tpu_custom_call.1} parent=1 // pred_region
      %245 = dma.done [#allocation4], 128
    $region41: #{tpu_custom_call.1} parent=1 // pred_fallthru
      _
    %246 = vsyncpa [#allocation3], 1
    %247 = vsyncpa [#allocation6], 1
    %248 = vsyncpa [#allocation4], 1

</llo_original>
